<compile_context>
chip_gen: v7x
topology: tpu7x:2x2x1
jax: 0.10.0
libtpu: 0.0.40
codegen_flags: <defaults>
</compile_context>

<pallas_src>
import functools

import jax
import jax.numpy as jnp
import numpy as np
from jax import lax
from jax.experimental import pallas as pl
from jax.experimental.pallas import tpu as pltpu


def _round_up(v, m):
    return -(-v // m) * m


def _cdiv(a, b):
    return -(-a // b)


def _laguerre_kan_ln_kernel(x_ref, w_ref, g_ref, b_ref, o_ref, *,
                            degree, alpha, eps, out_dim):
    # x_ref: (tb, I)              input dtype (cast to f32 here)
    # w_ref: ((d+1)*I, O_pad)     bf16, zero-padded beyond out_dim
    # g_ref, b_ref: (1, O_pad)    f32
    # o_ref: (tb, out_dim)        output dtype
    x = jnp.tanh(x_ref[...].astype(jnp.float32))

    # Laguerre recurrence in f32 (degree static -> fully unrolled).
    feats = [jnp.ones_like(x)]                                    # L_0
    if degree > 0:
        feats.append(1.0 + alpha - x)                             # L_1
    for k in range(2, degree + 1):
        lk = ((2.0 * (k - 1) + 1.0 + alpha - x) * feats[-1]
              - (k - 1 + alpha) * feats[-2]) / float(k)           # L_k
        feats.append(lk)

    # Single MXU matmul with K = (degree+1)*I (lane-axis concat of features).
    lhs = jnp.concatenate(feats, axis=-1).astype(jnp.bfloat16)    # (tb, K)
    y = jnp.dot(lhs, w_ref[...], preferred_element_type=jnp.float32)

    # Fused single-pass LayerNorm over the real out_dim columns. Padded W
    # columns are exactly zero -> padded y columns are exactly zero, so plain
    # full-width sums divided by out_dim give exact statistics.
    inv_n = 1.0 / float(out_dim)
    mean = jnp.sum(y, axis=-1, keepdims=True) * inv_n
    ex2 = jnp.sum(y * y, axis=-1, keepdims=True) * inv_n
    var = jnp.maximum(ex2 - mean * mean, 0.0)      # guard cancellation -> NaN
    y_norm = (y - mean) * lax.rsqrt(var + eps)
    out = y_norm * g_ref[...] + b_ref[...]
    o_ref[...] = out[:, :out_dim].astype(o_ref.dtype)


def prepare_laguerre_kan_params(coeffs, gamma, beta, *, degree):
    """One-time weight preprocessing (hoisted out of the per-call hot path).

    coeffs (I, O, d+1) -> W ((d+1)*I, O_pad) bf16 with row d*I + i = coeffs[i,:,d];
    gamma/beta -> (1, O_pad) f32. Columns beyond output_dim are zero-padded.
    """
    input_dim, output_dim, dp1 = coeffs.shape
    assert dp1 == degree + 1
    # Lane-dense matmul N tile: 128 for small outputs; multiples of 256 above
    # that (v6e/v7x MXU is 256 wide).
    o_pad = 128 if output_dim <= 128 else _round_up(output_dim, 256)
    w = jnp.transpose(coeffs.astype(jnp.float32), (2, 0, 1))      # (d+1, I, O)
    w = w.reshape(dp1 * input_dim, output_dim).astype(jnp.bfloat16)
    g = gamma.reshape(1, output_dim).astype(jnp.float32)
    b = beta.reshape(1, output_dim).astype(jnp.float32)
    if o_pad != output_dim:
        pad = o_pad - output_dim
        w = jnp.pad(w, ((0, 0), (0, pad)))
        g = jnp.pad(g, ((0, 0), (0, pad)))
        b = jnp.pad(b, ((0, 0), (0, pad)))
    return w, g, b


def _choose_block_b(B, vmem_cap_bytes):
    """Row tile: big enough to amortize ~0.35us/grid-step, but >=2 row blocks
    (even count for large B) so v7x's two TensorCores split the 'parallel'
    axis evenly. 1024 rows on 128-MiB-VMEM parts, 512 on 64-MiB parts."""
    if B <= 16:
        return _round_up(max(B, 8), 8)
    base = 1024 if vmem_cap_bytes >= (100 << 20) else 512
    if B <= 2 * base:
        return _round_up(_cdiv(B, 2), 8)      # exactly 2 row blocks
    nb = _cdiv(B, base)
    if nb % 2:
        nb += 1                               # even block count
    return _round_up(_cdiv(B, nb), 8)


def laguerre_kan_layernorm_prepared(x, w, g, b, *, degree, alpha, output_dim,
                                    eps=1e-5, block_b=None, out_dtype=None):
    """x: (..., input_dim). w, g, b: outputs of prepare_laguerre_kan_params."""
    k_dim, o_pad = w.shape
    input_dim = k_dim // (degree + 1)
    x2d = x.reshape(-1, input_dim)            # keep HBM dtype; cast in-kernel
    B = x2d.shape[0]
    out_dtype = x.dtype if out_dtype is None else out_dtype

    # Generation-aware VMEM capacity (v7x: 64 MiB, v5e/v6e: 128 MiB).
    try:
        vmem_cap = int(pltpu.get_tpu_info().vmem_capacity_bytes)
        small_vmem = vmem_cap < (100 << 20)
    except Exception:
        vmem_cap = 64 << 20                   # conservative, valid everywhere
        small_vmem = False

    if block_b is None:
        block_b = _choose_block_b(B, vmem_cap)
    n_blocks = _cdiv(B, block_b)              # ragged last block handled by Pallas

    # Constant-index blocks (W, gamma, beta): single-buffer them on
    # 64-MiB-VMEM parts to halve the resident weight footprint.
    def const_spec(shape):
        idx = lambda i: (0,) * len(shape)
        if small_vmem:
            try:
                return pl.BlockSpec(shape, idx, pipeline_mode=pl.Buffered(1))
            except Exception:
                pass
        return pl.BlockSpec(shape, idx)

    kernel = functools.partial(_laguerre_kan_ln_kernel, degree=degree,
                               alpha=float(alpha), eps=float(eps),
                               out_dim=output_dim)

    # Rough VMEM budget (double-buffered x/out tiles + weight slab + in-kernel
    # temporaries) with 2x headroom, capped below physical capacity.
    out_bytes = jnp.dtype(out_dtype).itemsize
    vmem_need = (2 * block_b * input_dim * x2d.dtype.itemsize    # x (2 bufs)
                 + 2 * block_b * output_dim * out_bytes          # out (2 bufs)
                 + 2 * k_dim * o_pad * 2                         # W (worst case)
                 + 4 * o_pad * 4                                 # gamma / beta
                 + block_b * (6 * k_dim + 12 * o_pad))           # temporaries
    vmem_limit = int(min(max(2 * vmem_need, 16 << 20), (vmem_cap * 3) // 4))

    out = pl.pallas_call(
        kernel,
        out_shape=jax.ShapeDtypeStruct((B, output_dim), out_dtype),
        grid_spec=pltpu.PrefetchScalarGridSpec(
            num_scalar_prefetch=0,
            grid=(n_blocks,),
            in_specs=[
                pl.BlockSpec((block_b, input_dim), lambda i: (i, 0)),
                const_spec((k_dim, o_pad)),
                const_spec((1, o_pad)),
                const_spec((1, o_pad)),
            ],
            out_specs=pl.BlockSpec((block_b, output_dim), lambda i: (i, 0)),
        ),
        compiler_params=pltpu.CompilerParams(
            dimension_semantics=("parallel",),
            vmem_limit_bytes=vmem_limit),
    )(x2d, w, g, b)
    return out


def laguerre_kan_layernorm(x, coeffs, gamma, beta, *, degree, alpha, eps=1e-5,
                           block_b=None, out_dtype=None):
    """Convenience wrapper: preprocesses weights then calls the kernel."""
    w, g, b = prepare_laguerre_kan_params(coeffs, gamma, beta, degree=degree)
    return laguerre_kan_layernorm_prepared(
        x, w, g, b, degree=degree, alpha=alpha, output_dim=coeffs.shape[1],
        eps=eps, block_b=block_b, out_dtype=out_dtype)


def _reference(x, coeffs, gamma, beta, *, degree, alpha, eps=1e-5):
    input_dim = coeffs.shape[0]
    x2d = jnp.tanh(x.reshape(-1, input_dim).astype(jnp.float32))
    feats = [jnp.ones_like(x2d)]
    if degree > 0:
        feats.append(1.0 + alpha - x2d)
    for k in range(2, degree + 1):
        feats.append(((2.0 * (k - 1) + 1.0 + alpha - x2d) * feats[k - 1]
                      - (k - 1 + alpha) * feats[k - 2]) / k)
    lag = jnp.stack(feats, axis=-1)                       # (B, I, D+1)
    y = jnp.einsum('bid,iod->bo', lag, coeffs.astype(jnp.float32))
    mean = jnp.mean(y, axis=-1, keepdims=True)
    var = jnp.mean((y - mean) ** 2, axis=-1, keepdims=True)
    return (y - mean) / jnp.sqrt(var + eps) * gamma + beta


if __name__ == "__main__":
    input_dim, output_dim, degree, alpha = 16, 32, 3, 0.5

    key = jax.random.PRNGKey(0)
    k_x, k_c = jax.random.split(key)

    # Deterministic parameter init (matches nn.init.normal_ std).
    std = 1.0 / (input_dim * (degree + 1))
    coeffs = jax.random.normal(k_c, (input_dim, output_dim, degree + 1),
                               dtype=jnp.float32) * std
    gamma = jnp.ones((output_dim,), jnp.float32)   # nn.LayerNorm default weight
    beta = jnp.zeros((output_dim,), jnp.float32)   # nn.LayerNorm default bias

    # Example input: any shape whose trailing elements flatten to input_dim.
    x = jax.random.normal(k_x, (4, 16, input_dim), dtype=jnp.float32)

    # Hoist the one-time weight preprocessing out of the hot path.
    w2d, g2d, b2d = prepare_laguerre_kan_params(coeffs, gamma, beta,
                                                degree=degree)

    out = laguerre_kan_layernorm_prepared(
        x, w2d, g2d, b2d, degree=degree, alpha=alpha, output_dim=output_dim)
    out = jax.block_until_ready(out)

    ref = _reference(x, coeffs, gamma, beta, degree=degree, alpha=alpha)
    # bf16 MXU operands (f32 accumulation) loosen the tolerance vs the pure-f32
    # reference; LayerNorm output is O(1), so these bounds remain meaningful.
    np.testing.assert_allclose(np.asarray(out), np.asarray(ref),
                               rtol=2e-2, atol=5e-2)
    print("KERNEL_OK")
</pallas_src>

<mosaic_0001>
module attributes {stable_mosaic.version = 11 : i64} {
  func.func @_laguerre_kan_ln_kernel(%arg0: i32, %arg1: memref<32x16xf32, #tpu.memory_space<vmem>>, %arg2: memref<64x128xbf16, #tpu.memory_space<vmem>>, %arg3: memref<1x128xf32, #tpu.memory_space<vmem>>, %arg4: memref<1x128xf32, #tpu.memory_space<vmem>>, %arg5: memref<32x32xf32, #tpu.memory_space<vmem>>) attributes {dimension_semantics = [#tpu.dimension_semantics<parallel>], iteration_bounds = array<i64: 2>, scalar_prefetch = 0 : i64, scratch_operands = 0 : i64, tpu.core_type = #tpu.core_type<tc>, window_params = [{transform_indices = @transform_0, window_bounds = array<i64: 32, 16>}, {pipeline_mode = #tpu.pipeline_mode<synchronous>, transform_indices = @transform_1, window_bounds = array<i64: 64, 128>}, {pipeline_mode = #tpu.pipeline_mode<synchronous>, transform_indices = @transform_2, window_bounds = array<i64: 1, 128>}, {pipeline_mode = #tpu.pipeline_mode<synchronous>, transform_indices = @transform_3, window_bounds = array<i64: 1, 128>}, {transform_indices = @transform_4, window_bounds = array<i64: 32, 32>}]} {
    %c0 = arith.constant 0 : index
    %c0_0 = arith.constant 0 : index
    %0 = vector.load %arg1[%c0, %c0_0] : memref<32x16xf32, #tpu.memory_space<vmem>>, vector<32x16xf32>
    %1 = math.tanh %0 : vector<32x16xf32>
    %cst = arith.constant 1.000000e+00 : f32
    %2 = vector.broadcast %cst : f32 to vector<32x16xf32>
    %cst_1 = arith.constant 1.500000e+00 : f32
    %3 = vector.broadcast %cst_1 : f32 to vector<32x16xf32>
    %4 = arith.subf %3, %1 : vector<32x16xf32>
    %cst_2 = arith.constant 3.500000e+00 : f32
    %5 = vector.broadcast %cst_2 : f32 to vector<32x16xf32>
    %6 = arith.subf %5, %1 : vector<32x16xf32>
    %7 = arith.mulf %6, %4 : vector<32x16xf32>
    %cst_3 = arith.constant 1.500000e+00 : f32
    %8 = vector.broadcast %cst_3 : f32 to vector<32x16xf32>
    %9 = arith.mulf %8, %2 : vector<32x16xf32>
    %10 = arith.subf %7, %9 : vector<32x16xf32>
    %cst_4 = arith.constant 2.000000e+00 : f32
    %11 = vector.broadcast %cst_4 : f32 to vector<32x16xf32>
    %12 = arith.divf %10, %11 : vector<32x16xf32>
    %cst_5 = arith.constant 5.500000e+00 : f32
    %13 = vector.broadcast %cst_5 : f32 to vector<32x16xf32>
    %14 = arith.subf %13, %1 : vector<32x16xf32>
    %15 = arith.mulf %14, %12 : vector<32x16xf32>
    %cst_6 = arith.constant 2.500000e+00 : f32
    %16 = vector.broadcast %cst_6 : f32 to vector<32x16xf32>
    %17 = arith.mulf %16, %4 : vector<32x16xf32>
    %18 = arith.subf %15, %17 : vector<32x16xf32>
    %cst_7 = arith.constant 3.000000e+00 : f32
    %19 = vector.broadcast %cst_7 : f32 to vector<32x16xf32>
    %20 = arith.divf %18, %19 : vector<32x16xf32>
    %21 = tpu.concatenate %2, %4, %12, %20 in 1 : vector<32x16xf32>, vector<32x16xf32>, vector<32x16xf32>, vector<32x16xf32> -> vector<32x64xf32>
    %22 = arith.truncf %21 : vector<32x64xf32> to vector<32x64xbf16>
    %c0_8 = arith.constant 0 : index
    %c0_9 = arith.constant 0 : index
    %23 = vector.load %arg2[%c0_8, %c0_9] : memref<64x128xbf16, #tpu.memory_space<vmem>>, vector<64x128xbf16>
    %cst_10 = arith.constant dense<0.000000e+00> : vector<32x128xf32>
    %24 = tpu.matmul %22, %23, %cst_10 {dimension_numbers = #tpu.dot_dimension_numbers<[1], [0], [0], [1], [0, 0, 1, 1], [], []>} : vector<32x64xbf16>, vector<64x128xbf16>, vector<32x128xf32> -> vector<32x128xf32>
    %cst_11 = arith.constant dense<0.000000e+00> : vector<32xf32>
    %25 = vector.multi_reduction <add>, %24, %cst_11 [1] : vector<32x128xf32> to vector<32xf32>
    %26 = vector.shape_cast %25 : vector<32xf32> to vector<32x1xf32>
    %cst_12 = arith.constant 3.125000e-02 : f32
    %27 = vector.broadcast %cst_12 : f32 to vector<32x1xf32>
    %28 = arith.mulf %26, %27 : vector<32x1xf32>
    %29 = arith.mulf %24, %24 : vector<32x128xf32>
    %cst_13 = arith.constant dense<0.000000e+00> : vector<32xf32>
    %30 = vector.multi_reduction <add>, %29, %cst_13 [1] : vector<32x128xf32> to vector<32xf32>
    %31 = vector.shape_cast %30 : vector<32xf32> to vector<32x1xf32>
    %cst_14 = arith.constant 3.125000e-02 : f32
    %32 = vector.broadcast %cst_14 : f32 to vector<32x1xf32>
    %33 = arith.mulf %31, %32 : vector<32x1xf32>
    %34 = arith.mulf %28, %28 : vector<32x1xf32>
    %35 = arith.subf %33, %34 : vector<32x1xf32>
    %cst_15 = arith.constant 0.000000e+00 : f32
    %36 = vector.broadcast %cst_15 : f32 to vector<32x1xf32>
    %37 = arith.maximumf %35, %36 : vector<32x1xf32>
    %38 = vector.broadcast %28 : vector<32x1xf32> to vector<32x128xf32>
    %39 = arith.subf %24, %38 : vector<32x128xf32>
    %cst_16 = arith.constant 9.99999974E-6 : f32
    %40 = vector.broadcast %cst_16 : f32 to vector<32x1xf32>
    %41 = arith.addf %37, %40 : vector<32x1xf32>
    %42 = math.rsqrt %41 : vector<32x1xf32>
    %43 = vector.broadcast %42 : vector<32x1xf32> to vector<32x128xf32>
    %44 = arith.mulf %39, %43 : vector<32x128xf32>
    %c0_17 = arith.constant 0 : index
    %c0_18 = arith.constant 0 : index
    %45 = vector.load %arg3[%c0_17, %c0_18] : memref<1x128xf32, #tpu.memory_space<vmem>>, vector<1x128xf32>
    %46 = vector.broadcast %45 : vector<1x128xf32> to vector<32x128xf32>
    %47 = arith.mulf %44, %46 : vector<32x128xf32>
    %c0_19 = arith.constant 0 : index
    %c0_20 = arith.constant 0 : index
    %48 = vector.load %arg4[%c0_19, %c0_20] : memref<1x128xf32, #tpu.memory_space<vmem>>, vector<1x128xf32>
    %49 = vector.broadcast %48 : vector<1x128xf32> to vector<32x128xf32>
    %50 = arith.addf %47, %49 : vector<32x128xf32>
    %51 = vector.extract_strided_slice %50 {offsets = [0, 0], sizes = [32, 32], strides = [1, 1]} : vector<32x128xf32> to vector<32x32xf32>
    %c0_21 = arith.constant 0 : index
    %c0_22 = arith.constant 0 : index
    %52 = vector.load %arg5[%c0_21, %c0_22] : memref<32x32xf32, #tpu.memory_space<vmem>>, vector<32x32xf32>
    tpu.vector_store %arg5[%c0_21, %c0_22], %51 {strides = array<i32>} : memref<32x32xf32, #tpu.memory_space<vmem>>, vector<32x32xf32>,
    return
  }
  func.func @transform_0(%arg0: i32) -> (i32, i32) {
    %c0_i32 = arith.constant 0 : i32
    %c0_i32_0 = arith.constant 0 : i32
    return %arg0, %c0_i32 : i32, i32
  }
  func.func @transform_1(%arg0: i32) -> (i32, i32) {
    %c0_i32 = arith.constant 0 : i32
    %c0_i32_0 = arith.constant 0 : i32
    %c0_i32_1 = arith.constant 0 : i32
    return %c0_i32, %c0_i32_0 : i32, i32
  }
  func.func @transform_2(%arg0: i32) -> (i32, i32) {
    %c0_i32 = arith.constant 0 : i32
    %c0_i32_0 = arith.constant 0 : i32
    %c0_i32_1 = arith.constant 0 : i32
    return %c0_i32, %c0_i32_0 : i32, i32
  }
  func.func @transform_3(%arg0: i32) -> (i32, i32) {
    %c0_i32 = arith.constant 0 : i32
    %c0_i32_0 = arith.constant 0 : i32
    %c0_i32_1 = arith.constant 0 : i32
    return %c0_i32, %c0_i32_0 : i32, i32
  }
  func.func @transform_4(%arg0: i32) -> (i32, i32) {
    %c0_i32 = arith.constant 0 : i32
    %c0_i32_0 = arith.constant 0 : i32
    return %arg0, %c0_i32 : i32, i32
  }
}

</mosaic_0001>

<llo_original>
// kernel: tpu_custom_call.1
$region0: #{tpu_custom_call.1}
  #allocation0 [shape = 'u32[]', space=smem, size = 0x4, offset = 0x4, fixed_abs, tag = 'smem constant byte address 0x4 - core index']
  #allocation1 [shape = 'u32[144,128]{1,0:T(1,128)}', space=vmem, size = 0x12000, scoped, tag = 'internal scratch']
  %s0 = inlined_call_operand.vmem [shape: f32[64,16], index: 0, kind: input, shape index: {}]
  %s1 = inlined_call_operand.vmem [shape: bf16[64,128], index: 1, kind: input, shape index: {}]
  %s2 = inlined_call_operand.vmem [shape: f32[1,128], index: 2, kind: input, shape index: {}]
  %s3 = inlined_call_operand.vmem [shape: f32[1,128], index: 3, kind: input, shape index: {}]
  %s4 = inlined_call_operand.vmem [shape: f32[64,32], index: 4, kind: output, shape index: {}]
  %s5 = sld [smem:[#allocation0]]
  $region49: #{tpu_custom_call.1} parent=0
    _
  %s7 = ssub.s32 1, %s5
  %s8 = scalar_select 0, %s7, %s5
  loop: start=0, step=1, limit=4
  $region2: #{tpu_custom_call.1} parent=0 // loop_pre_header
    _
  $region3: #{tpu_custom_call.1} parent=0 // loop_header
    %s10 = sphi 0, %s14
    %p11 = scmp.ge.s32.totalorder %s10, 4
    %s20 = sphi 0, %s22
    %s23 = sphi 0, %s20
    %s24 = sphi 0, %s23
    %s40 = sphi 0, %s24
    %s44 = sphi 0, %s44
    %s46 = sphi 0, %s44
    %s47 = sphi 0, %s46
    %s61 = sphi 0, %s47
    %s65 = sphi 0, %s65
    %s67 = sphi 0, %s65
    %s68 = sphi 0, %s67
    %s82 = sphi 0, %s68
    %s86 = sphi 0, %s86
    %s88 = sphi 0, %s86
    %s89 = sphi 0, %s88
    %s103 = sphi 0, %s89
    %s109 = sphi 0, %s111
    %s112 = sphi 0, %s109
    %s113 = sphi 0, %s112
    %s129 = sphi 0, %s113
  $region4: #{tpu_custom_call.1} parent=0 // loop_header_branch
    %13 = sbr.rel (%p11) target = $region8
  $region5: #{tpu_custom_call.1} parent=0 // loop_body
    %s15 = ssub.s32 %s10, 1
    %s16 = ssub.s32 %s10, 2
    %s17 = sadd.s32 %s10, 1
    %s18 = ssub.s32 %s10, %s17
    %p19 = scmp.eq.s32.totalorder %s18, 0
    %s21 = sadd.s32 %s20, 1
    %s22 = scalar_select %p19, %s20, %s21
    %p25 = pneg %p19
    %p26 = scmp.eq.s32.totalorder %s10, 1
    %p27 = por %p25, %p26
    %p28 = scmp.ne.s32.totalorder %s20, %s23
    %p29 = scmp.eq.s32.totalorder %s10, 0
    %p30 = por %p28, %p29
    %p31 = scmp.ne.s32.totalorder %s20, %s23
    %p32 = scmp.eq.s32.totalorder %s15, 1
    %p33 = por %p31, %p32
    %p34 = scmp.ne.s32.totalorder %s23, %s24
    %p35 = scmp.eq.s32.totalorder %s15, 0
    %p36 = por %p34, %p35
    %p37 = scmp.ne.s32.totalorder %s23, %s24
    %p38 = scmp.eq.s32.totalorder %s16, 1
    %p39 = por %p37, %p38
    %p41 = scmp.ne.s32.totalorder %s24, %s40
    %p42 = scmp.eq.s32.totalorder %s16, 0
    %p43 = por %p41, %p42
    %s45 = sadd.s32 %s44, 1
    %p48 = scmp.eq.s32.totalorder %s10, 1
    %p49 = scmp.ne.s32.totalorder %s44, %s46
    %p50 = scmp.eq.s32.totalorder %s10, 0
    %p51 = por %p49, %p50
    %p52 = scmp.ne.s32.totalorder %s44, %s46
    %p53 = scmp.eq.s32.totalorder %s15, 1
    %p54 = por %p52, %p53
    %p55 = scmp.ne.s32.totalorder %s46, %s47
    %p56 = scmp.eq.s32.totalorder %s15, 0
    %p57 = por %p55, %p56
    %p58 = scmp.ne.s32.totalorder %s46, %s47
    %p59 = scmp.eq.s32.totalorder %s16, 1
    %p60 = por %p58, %p59
    %p62 = scmp.ne.s32.totalorder %s47, %s61
    %p63 = scmp.eq.s32.totalorder %s16, 0
    %p64 = por %p62, %p63
    %s66 = sadd.s32 %s65, 1
    %p69 = scmp.eq.s32.totalorder %s10, 1
    %p70 = scmp.ne.s32.totalorder %s65, %s67
    %p71 = scmp.eq.s32.totalorder %s10, 0
    %p72 = por %p70, %p71
    %p73 = scmp.ne.s32.totalorder %s65, %s67
    %p74 = scmp.eq.s32.totalorder %s15, 1
    %p75 = por %p73, %p74
    %p76 = scmp.ne.s32.totalorder %s67, %s68
    %p77 = scmp.eq.s32.totalorder %s15, 0
    %p78 = por %p76, %p77
    %p79 = scmp.ne.s32.totalorder %s67, %s68
    %p80 = scmp.eq.s32.totalorder %s16, 1
    %p81 = por %p79, %p80
    %p83 = scmp.ne.s32.totalorder %s68, %s82
    %p84 = scmp.eq.s32.totalorder %s16, 0
    %p85 = por %p83, %p84
    %s87 = sadd.s32 %s86, 1
    %p90 = scmp.eq.s32.totalorder %s10, 1
    %p91 = scmp.ne.s32.totalorder %s86, %s88
    %p92 = scmp.eq.s32.totalorder %s10, 0
    %p93 = por %p91, %p92
    %p94 = scmp.ne.s32.totalorder %s86, %s88
    %p95 = scmp.eq.s32.totalorder %s15, 1
    %p96 = por %p94, %p95
    %p97 = scmp.ne.s32.totalorder %s88, %s89
    %p98 = scmp.eq.s32.totalorder %s15, 0
    %p99 = por %p97, %p98
    %p100 = scmp.ne.s32.totalorder %s88, %s89
    %p101 = scmp.eq.s32.totalorder %s16, 1
    %p102 = por %p100, %p101
    %p104 = scmp.ne.s32.totalorder %s89, %s103
    %p105 = scmp.eq.s32.totalorder %s16, 0
    %p106 = por %p104, %p105
    %s107 = ssub.s32 %s10, %s17
    %p108 = scmp.eq.s32.totalorder %s107, 0
    %s110 = sadd.s32 %s109, 1
    %s111 = scalar_select %p108, %s109, %s110
    %p114 = pneg %p108
    %p115 = scmp.eq.s32.totalorder %s10, 1
    %p116 = por %p114, %p115
    %p117 = scmp.ne.s32.totalorder %s109, %s112
    %p118 = scmp.eq.s32.totalorder %s10, 0
    %p119 = por %p117, %p118
    %p120 = scmp.ne.s32.totalorder %s109, %s112
    %p121 = scmp.eq.s32.totalorder %s15, 1
    %p122 = por %p120, %p121
    %p123 = scmp.ne.s32.totalorder %s112, %s113
    %p124 = scmp.eq.s32.totalorder %s15, 0
    %p125 = por %p123, %p124
    %p126 = scmp.ne.s32.totalorder %s112, %s113
    %p127 = scmp.eq.s32.totalorder %s16, 1
    %p128 = por %p126, %p127
    %p130 = scmp.ne.s32.totalorder %s113, %s129
    %p131 = scmp.eq.s32.totalorder %s16, 0
    %p132 = por %p130, %p131
    %p133 = scmp.le.s32.totalorder 1, %s10
    %p134 = scmp.lt.s32.totalorder %s10, 3
    %p135 = pnand %p133, %p134
    %p136 = pneg %p135
    // Predicated region
    $region9: #{tpu_custom_call.1} parent=5 // pred_check
      _
    $region10: #{tpu_custom_call.1} parent=5 // pred_check_branch
      %138 = sbr.rel (%p135) target = $region12
    $region11: #{tpu_custom_call.1} parent=5 // pred_region
      %s139 = ssub.s32 %s10, 1
      // Predicated region
      $region13: #{tpu_custom_call.1} parent=11 // pred_check
        %p140 = pneg %p57
      $region14: #{tpu_custom_call.1} parent=11 // pred_check_branch
        %142 = sbr.rel (%p140) target = $region16
      $region15: #{tpu_custom_call.1} parent=11 // pred_region
        _
      $region16: #{tpu_custom_call.1} parent=11 // pred_fallthru
        _
      // Predicated region
      $region17: #{tpu_custom_call.1} parent=11 // pred_check
        %p143 = pneg %p78
      $region18: #{tpu_custom_call.1} parent=11 // pred_check_branch
        %145 = sbr.rel (%p143) target = $region20
      $region19: #{tpu_custom_call.1} parent=11 // pred_region
        _
      $region20: #{tpu_custom_call.1} parent=11 // pred_fallthru
        _
      // Predicated region
      $region21: #{tpu_custom_call.1} parent=11 // pred_check
        %p146 = pneg %p99
      $region22: #{tpu_custom_call.1} parent=11 // pred_check_branch
        %148 = sbr.rel (%p146) target = $region24
      $region23: #{tpu_custom_call.1} parent=11 // pred_region
        _
      $region24: #{tpu_custom_call.1} parent=11 // pred_fallthru
        _
    $region12: #{tpu_custom_call.1} parent=5 // pred_fallthru
      _
    %p149 = scmp.lt.s32.totalorder %s10, 2
    // Predicated region
    $region25: #{tpu_custom_call.1} parent=5 // pred_check
      %p150 = pneg %p149
    $region26: #{tpu_custom_call.1} parent=5 // pred_check_branch
      %152 = sbr.rel (%p150) target = $region28
    $region27: #{tpu_custom_call.1} parent=5 // pred_region
      // Predicated region
      $region29: #{tpu_custom_call.1} parent=27 // pred_check
        %p153 = pneg %p30
      $region30: #{tpu_custom_call.1} parent=27 // pred_check_branch
        %155 = sbr.rel (%p153) target = $region32
      $region31: #{tpu_custom_call.1} parent=27 // pred_region
        %s156 = smul.u32 4, %s10
        %p157 = scmp.lt.s32.totalorder %s156, 7
        %s158 = scalar_select %p157, %s156, 7
        %s159 = smul.addr %s158, 8
        %s160 = scalar_lea.vmem %s0, %s159
        %s161 = smul.u32 4, %s10
      $region32: #{tpu_custom_call.1} parent=27 // pred_fallthru
        _
    $region28: #{tpu_custom_call.1} parent=5 // pred_fallthru
      _
    %p162 = scmp.le.s32.totalorder 1, %s10
    %p163 = scmp.lt.s32.totalorder %s10, 3
    %p164 = pnand %p162, %p163
    %p165 = pneg %p164
    // Predicated region
    $region33: #{tpu_custom_call.1} parent=5 // pred_check
      _
    $region34: #{tpu_custom_call.1} parent=5 // pred_check_branch
      %167 = sbr.rel (%p164) target = $region36
    $region35: #{tpu_custom_call.1} parent=5 // pred_region
      %s168 = ssub.s32 %s10, 1
      %s169 = smul.u32 4, %s15
      %p170 = scmp.lt.s32.totalorder %s169, 7
      %s171 = scalar_select %p170, %s169, 7
      %s172 = smul.addr %s171, 8
      %s173 = scalar_lea.vmem %s0, %s172
      %p174 = pneg %p36
      %p175 = pneg %p33
      %p176 = pneg %p57
      %p177 = pneg %p54
      %p178 = pneg %p78
      %p179 = pneg %p75
      %p180 = pneg %p99
      %p181 = pneg %p96
      %p182 = pneg %p125
      %p183 = pneg %p122
      %s184 = smul.u32 4, %s15
      %p185 = scmp.lt.s32.totalorder %s184, 7
      %s186 = scalar_select %p185, %s184, 7
      %s187 = smul.addr %s186, 8
      %s188 = scalar_lea.vmem %s4, %s187
      %s189 = smul.u32 4, %s15
      %p190 = scmp.lt.s32.totalorder %s189, 7
      %s191 = scalar_select %p190, %s189, 7
      %s192 = smul.addr %s191, 8
      %s193 = scalar_lea.vmem %s0, %s192
      %s194 = smul.u32 4, %s15
      %s195 = smul.u32 4, %s15
      %p196 = scmp.lt.s32.totalorder %s195, 7
      %s197 = scalar_select %p196, %s195, 7
      %s198 = smul.addr %s197, 8
      %s199 = scalar_lea.vmem %s4, %s198
      %s200 = smul.u32 4, %s15
      %v202 = vld [vmem:[%s193] sm:$0xff]
      %v203 = vld [vmem:[%s193 + $0x8] sm:$0xff]
      %v204 = vld [vmem:[%s193 + $0x10] sm:$0xff]
      %v205 = vld [vmem:[%s193 + $0x18] sm:$0xff]
      %v206 = vtanh.pop %v202
      %v207 = vtanh.pop %v203
      %v208 = vtanh.pop %v204
      %v209 = vtanh.pop %v205
      %v210 = vsub.f32 1.5, %v206
      %v211 = vsub.f32 1.5, %v207
      %v212 = vsub.f32 1.5, %v208
      %v213 = vsub.f32 1.5, %v209
      %v214 = vsub.f32 3.5, %v206
      %v215 = vsub.f32 3.5, %v207
      %v216 = vsub.f32 3.5, %v208
      %v217 = vsub.f32 3.5, %v209
      %v218 = vmul.f32 %v214, %v210
      %v219 = vmul.f32 %v215, %v211
      %v220 = vmul.f32 %v216, %v212
      %v221 = vmul.f32 %v217, %v213
      %v222 = vsub.f32 %v218, 1.5
      %v223 = vsub.f32 %v219, 1.5
      %v224 = vsub.f32 %v220, 1.5
      %v225 = vsub.f32 %v221, 1.5
      %v226 = vrcp.pop 2.0
      %v227 = vmul.f32 %v222, %v226
      %v228 = vmul.f32 %v223, %v226
      %v229 = vmul.f32 %v224, %v226
      %v230 = vmul.f32 %v225, %v226
      %v231 = vsub.f32 5.5, %v206
      %v232 = vsub.f32 5.5, %v207
      %v233 = vsub.f32 5.5, %v208
      %v234 = vsub.f32 5.5, %v209
      %v235 = vmul.f32 %v231, %v227
      %v236 = vmul.f32 %v232, %v228
      %v237 = vmul.f32 %v233, %v229
      %v238 = vmul.f32 %v234, %v230
      %v239 = vmul.f32 %v210, 2.5
      %v240 = vmul.f32 %v211, 2.5
      %v241 = vmul.f32 %v212, 2.5
      %v242 = vmul.f32 %v213, 2.5
      %v243 = vsub.f32 %v235, %v239
      %v244 = vsub.f32 %v236, %v240
      %v245 = vsub.f32 %v237, %v241
      %v246 = vsub.f32 %v238, %v242
      %v247 = vrcp.pop 3.0
      %v248 = vmul.f32 %v243, %v247
      %v249 = vmul.f32 %v244, %v247
      %v250 = vmul.f32 %v245, %v247
      %v251 = vmul.f32 %v246, %v247
      %256 = vrot.lane.b32.xlu0 %v210, 16
      %v257 = vpop.permute.xlu0 %256
      %258 = vrot.lane.b32.xlu0 %v211, 16
      %v259 = vpop.permute.xlu0 %258
      %260 = vrot.lane.b32.xlu0 %v212, 16
      %v261 = vpop.permute.xlu0 %260
      %262 = vrot.lane.b32.xlu0 %v213, 16
      %v263 = vpop.permute.xlu0 %262
      %272 = vrot.lane.b32.xlu0 %v227, 32
      %v273 = vpop.permute.xlu0 %272
      %274 = vrot.lane.b32.xlu0 %v228, 32
      %v275 = vpop.permute.xlu0 %274
      %276 = vrot.lane.b32.xlu0 %v229, 32
      %v277 = vpop.permute.xlu0 %276
      %278 = vrot.lane.b32.xlu0 %v230, 32
      %v279 = vpop.permute.xlu0 %278
      %288 = vrot.lane.b32.xlu0 %v248, 48
      %v289 = vpop.permute.xlu0 %288
      %290 = vrot.lane.b32.xlu0 %v249, 48
      %v291 = vpop.permute.xlu0 %290
      %292 = vrot.lane.b32.xlu0 %v250, 48
      %v293 = vpop.permute.xlu0 %292
      %294 = vrot.lane.b32.xlu0 %v251, 48
      %v295 = vpop.permute.xlu0 %294
      %vm300 = vcmask 130048
      %v301 = vsel %vm300, 1.0, %v257
      %v302 = vsel %vm300, 1.0, %v259
      %v303 = vsel %vm300, 1.0, %v261
      %v304 = vsel %vm300, 1.0, %v263
      %vm305 = vcmask 261120
      %v306 = vsel %vm305, %v301, %v273
      %v307 = vsel %vm305, %v302, %v275
      %v308 = vsel %vm305, %v303, %v277
      %v309 = vsel %vm305, %v304, %v279
      %vm310 = vcmask 392192
      %v311 = vsel %vm310, %v306, %v289
      %v312 = vsel %vm310, %v307, %v291
      %v313 = vsel %vm310, %v308, %v293
      %v314 = vsel %vm310, %v309, %v295
      %v315 = vpack.c.bf16 %v312, %v311
      %v316 = vpack.c.bf16 %v314, %v313
      %v317 = vld [vmem:[%s1] sm:$0xf]
      %v318 = vld [vmem:[%s1 + $0x4] sm:$0xf]
      %v319 = vld [vmem:[%s1 + $0x8] sm:$0xf]
      %v320 = vld [vmem:[%s1 + $0xc] sm:$0xf]
      %v321 = vld [vmem:[%s1 + $0x10] sm:$0xf]
      %v322 = vld [vmem:[%s1 + $0x14] sm:$0xf]
      %v323 = vld [vmem:[%s1 + $0x18] sm:$0xf]
      %v324 = vld [vmem:[%s1 + $0x1c] sm:$0xf]
      %v333 = vunpack.c.l.b16 %v317
      %v334 = vunpack.c.l.b16 %v318
      %v335 = vunpack.c.l.b16 %v319
      %v336 = vunpack.c.l.b16 %v320
      %v337 = vunpack.c.l.b16 %v321
      %v338 = vunpack.c.l.b16 %v322
      %v339 = vunpack.c.l.b16 %v323
      %v340 = vunpack.c.l.b16 %v324
      %v341 = vpack.c.b16 %v334, %v333
      %v342 = vpack.c.b16 %v336, %v335
      %v343 = vpack.c.b16 %v338, %v337
      %v344 = vpack.c.b16 %v340, %v339
      %vm349 = vcmask 523264
      %v351 = vsel %vm349, %v315, 0
      %v354 = vsel %vm349, %v316, 0
      %356 = vmatprep.subr.bf16.mxu0 0
      %357 = vmatpush1.bf16.msra.mxu0 %v341
      %358 = vmatprep.subr.bf16.mxu0 0
      %359 = vmatpush1.bf16.msra.mxu0 %v342
      %360 = vmatprep.subr.bf16.mxu0 0
      %361 = vmatpush1.bf16.msra.mxu0 %v343
      %362 = vmatprep.subr.bf16.mxu0 0
      %363 = vmatpush1.bf16.msra.mxu0 %v344
      %364 = vmatprep.subr.bf16.mxu0 0
      %365 = vmatpush1.bf16.msra.mxu0 0
      %366 = vmatprep.subr.bf16.mxu0 0
      %367 = vmatpush1.bf16.msra.mxu0 0
      %368 = vmatprep.subr.bf16.mxu0 0
      %369 = vmatpush1.bf16.msra.mxu0 0
      %370 = vmatprep.subr.bf16.mxu0 0
      %371 = vmatpush1.bf16.msra.mxu0 0
      %372 = vmatprep.subr.bf16.mxu0 0
      %373 = vmatpush1.bf16.msra.mxu0 0
      %374 = vmatprep.subr.bf16.mxu0 0
      %375 = vmatpush1.bf16.msra.mxu0 0
      %376 = vmatprep.subr.bf16.mxu0 0
      %377 = vmatpush1.bf16.msra.mxu0 0
      %378 = vmatprep.subr.bf16.mxu0 0
      %379 = vmatpush1.bf16.msra.mxu0 0
      %380 = vmatprep.subr.bf16.mxu0 0
      %381 = vmatpush1.bf16.msra.mxu0 0
      %382 = vmatprep.subr.bf16.mxu0 0
      %383 = vmatpush1.bf16.msra.mxu0 0
      %384 = vmatprep.subr.bf16.mxu0 0
      %385 = vmatpush1.bf16.msra.mxu0 0
      %386 = vmatprep.subr.bf16.mxu0 0
      %387 = vmatpush1.bf16.msra.mxu0 0
      %388 = vmatprep.mubr.bf16.mxu0 0
      %389 = vmatmul.mubr.bf16.gmra.mrb[0].mxu0 %v351
      %v390 = vpop.f32.mrb[0].mxu0
      %v391 = vadd.f32 0.0, %v390
      %v392 = vpop.f32.mrb[0].mxu0
      %v393 = vpop.f32.mrb[0].mxu0
      %v394 = vadd.f32 0.0, %v393
      %v395 = vpop.f32.mrb[0].mxu0
      %396 = vmatprep.mubr.bf16.mxu0 0
      %397 = vmatmul.mubr.bf16.gmra.mrb[0].mxu0 %v354
      %v398 = vpop.f32.mrb[0].mxu0
      %v399 = vadd.f32 0.0, %v398
      %v400 = vpop.f32.mrb[0].mxu0
      %v401 = vpop.f32.mrb[0].mxu0
      %v402 = vadd.f32 0.0, %v401
      %v403 = vpop.f32.mrb[0].mxu0
      %404 = vdwg.mxu0
      %405 = vadd.xlane.f32.xlu0 %v391
      %v406 = vpop.xlane.xlu0 %405
      %407 = vadd.xlane.f32.xlu0 %v394
      %v408 = vpop.xlane.xlu0 %407
      %409 = vadd.xlane.f32.xlu0 %v399
      %v410 = vpop.xlane.xlu0 %409
      %411 = vadd.xlane.f32.xlu0 %v402
      %v412 = vpop.xlane.xlu0 %411
      %v413 = vmul.f32 %v406, 0.03125
      %v414 = vmul.f32 %v408, 0.03125
      %v415 = vmul.f32 %v410, 0.03125
      %v416 = vmul.f32 %v412, 0.03125
      %v417 = vmul.f32 %v391, %v391
      %v418 = vmul.f32 %v394, %v394
      %v419 = vmul.f32 %v399, %v399
      %v420 = vmul.f32 %v402, %v402
      %421 = vadd.xlane.f32.xlu0 %v417
      %v422 = vpop.xlane.xlu0 %421
      %423 = vadd.xlane.f32.xlu0 %v418
      %v424 = vpop.xlane.xlu0 %423
      %425 = vadd.xlane.f32.xlu0 %v419
      %v426 = vpop.xlane.xlu0 %425
      %427 = vadd.xlane.f32.xlu0 %v420
      %v428 = vpop.xlane.xlu0 %427
      %v429 = vmul.f32 %v422, 0.03125
      %v430 = vmul.f32 %v424, 0.03125
      %v431 = vmul.f32 %v426, 0.03125
      %v432 = vmul.f32 %v428, 0.03125
      %v433 = vmul.f32 %v413, %v413
      %v434 = vmul.f32 %v414, %v414
      %v435 = vmul.f32 %v415, %v415
      %v436 = vmul.f32 %v416, %v416
      %v437 = vsub.f32 %v429, %v433
      %v438 = vsub.f32 %v430, %v434
      %v439 = vsub.f32 %v431, %v435
      %v440 = vsub.f32 %v432, %v436
      %v441 = vmax.f32 %v437, 0.0
      %v442 = vmax.f32 %v438, 0.0
      %v443 = vmax.f32 %v439, 0.0
      %v444 = vmax.f32 %v440, 0.0
      %v445 = vsub.f32 %v391, %v413
      %v446 = vsub.f32 %v394, %v414
      %v447 = vsub.f32 %v399, %v415
      %v448 = vsub.f32 %v402, %v416
      %v449 = vadd.f32 %v441, 1e-05
      %v450 = vadd.f32 %v442, 1e-05
      %v451 = vadd.f32 %v443, 1e-05
      %v452 = vadd.f32 %v444, 1e-05
      %v453 = vrsqrt.pop %v449
      %v454 = vrsqrt.pop %v450
      %v455 = vrsqrt.pop %v451
      %v456 = vrsqrt.pop %v452
      %v457 = vmul.f32 %v445, %v453
      %v458 = vmul.f32 %v446, %v454
      %v459 = vmul.f32 %v447, %v455
      %v460 = vmul.f32 %v448, %v456
      %v461 = vld [vmem:[%s2] sm:$0x1]
      %v463 = vlaneseq
      %v464 = vshrl.u32 %v463, 7
      %v465 = vsub.s32 0, %v464
      %v466 = vrot.slane %v461, %v465
      %v468 = vmul.f32 %v457, %v466
      %v469 = vmul.f32 %v458, %v466
      %v470 = vmul.f32 %v459, %v466
      %v471 = vmul.f32 %v460, %v466
      %v472 = vld [vmem:[%s3] sm:$0x1]
      %v474 = vlaneseq
      %v475 = vshrl.u32 %v474, 7
      %v476 = vsub.s32 0, %v475
      %v477 = vrot.slane %v472, %v476
      %v479 = vadd.f32 %v468, %v477
      %v480 = vadd.f32 %v469, %v477
      %v481 = vadd.f32 %v470, %v477
      %v482 = vadd.f32 %v471, %v477
      %483 = vst.msk [vmem:[%s199] sm:$0xff] %vm305, %v479
      %484 = vst.msk [vmem:[%s199 + $0x8] sm:$0xff] %vm305, %v480
      %485 = vst.msk [vmem:[%s199 + $0x10] sm:$0xff] %vm305, %v481
      %486 = vst.msk [vmem:[%s199 + $0x18] sm:$0xff] %vm305, %v482
      %s487 = smul.u32 4, %s15
      %p488 = scmp.lt.s32.totalorder %s487, 7
      %s489 = scalar_select %p488, %s487, 7
      %s490 = smul.addr %s489, 8
      %s491 = scalar_lea.vmem %s4, %s490
      // Predicated region
      $region37: #{tpu_custom_call.1} parent=35 // pred_check
        %p492 = pneg %p122
      $region38: #{tpu_custom_call.1} parent=35 // pred_check_branch
        %494 = sbr.rel (%p492) target = $region40
      $region39: #{tpu_custom_call.1} parent=35 // pred_region
        %s495 = smul.u32 4, %s15
      $region40: #{tpu_custom_call.1} parent=35 // pred_fallthru
        _
    $region36: #{tpu_custom_call.1} parent=5 // pred_fallthru
      _
    %p496 = scmp.le.s32.totalorder 2, %s10
    // Predicated region
    $region41: #{tpu_custom_call.1} parent=5 // pred_check
      %p497 = pneg %p496
    $region42: #{tpu_custom_call.1} parent=5 // pred_check_branch
      %499 = sbr.rel (%p497) target = $region44
    $region43: #{tpu_custom_call.1} parent=5 // pred_region
      %s500 = ssub.s32 %s10, 2
      // Predicated region
      $region45: #{tpu_custom_call.1} parent=43 // pred_check
        %p501 = pneg %p128
      $region46: #{tpu_custom_call.1} parent=43 // pred_check_branch
        %503 = sbr.rel (%p501) target = $region48
      $region47: #{tpu_custom_call.1} parent=43 // pred_region
        %s504 = smul.u32 4, %s16
        %p505 = scmp.lt.s32.totalorder %s504, 7
        %s506 = scalar_select %p505, %s504, 7
        %s507 = smul.addr %s506, 8
        %s508 = scalar_lea.vmem %s4, %s507
      $region48: #{tpu_custom_call.1} parent=43 // pred_fallthru
        _
    $region44: #{tpu_custom_call.1} parent=5 // pred_fallthru
      _
  $region6: #{tpu_custom_call.1} parent=0 // loop_footer
    %s14 = sadd.s32 1, %s10
  $region7: #{tpu_custom_call.1} parent=0 // loop_footer_branch
    %9 = sbr.rel target = $region3
  $region8: #{tpu_custom_call.1} parent=0 // loop_exit
    _

</llo_original>
